<compile_context>
chip_gen: v5e
topology: v5e:2x2
jax: 0.10.0
libtpu: 0.0.40
codegen_flags: <defaults>
</compile_context>

<pallas_src>
import functools
import math

import jax
import jax.numpy as jnp
import numpy as np
from jax.experimental import pallas as pl
from jax.experimental.pallas import tpu as pltpu


# ----------------------------------------------------------------------------
# helpers
# ----------------------------------------------------------------------------
def _pick_tile(dim, preferred):
    """Largest preferred tile that divides `dim`, else the full dim (always legal)."""
    for t in preferred:
        if dim % t == 0 and t <= dim:
            return t
    return dim


# ----------------------------------------------------------------------------
# Pallas kernels
# ----------------------------------------------------------------------------
def _matmul_kernel(act, x_ref, w_ref, b_ref, o_ref, acc_ref):
    """Tiled y = act(x @ w + b); f32 accumulation in VMEM scratch."""
    @pl.when(pl.program_id(2) == 0)
    def _():
        acc_ref[...] = jnp.zeros_like(acc_ref)

    acc_ref[...] += jnp.dot(
        x_ref[...], w_ref[...], preferred_element_type=jnp.float32
    )

    @pl.when(pl.program_id(2) == pl.num_programs(2) - 1)
    def _():
        y = acc_ref[...] + b_ref[...]
        if act == "gelu":
            # TODO(synk): HF BERT uses exact erf GELU; tanh approx used here
            # (it matches the PreSumm decoder's gelu exactly).
            y = jax.nn.gelu(y, approximate=True)
        o_ref[...] = y.astype(o_ref.dtype)


def linear(x, w, b, act=None, out_dtype=jnp.bfloat16):
    """x: (..., K) @ w: (K, N) + b: (N,) -> (..., N). bf16 MXU inputs, f32 acc."""
    orig_shape = x.shape
    K = orig_shape[-1]
    N = w.shape[1]
    x2 = x.reshape(-1, K).astype(jnp.bfloat16)
    w2 = w.astype(jnp.bfloat16)
    M = x2.shape[0]

    tm = _pick_tile(M, (512, 256, 128))
    tn = _pick_tile(N, (512, 256, 128))
    tk = _pick_tile(K, (512, 256))
    grid = (M // tm, N // tn, K // tk)

    out = pl.pallas_call(
        functools.partial(_matmul_kernel, act),
        out_shape=jax.ShapeDtypeStruct((M, N), out_dtype),
        grid=grid,
        in_specs=[
            pl.BlockSpec((tm, tk), lambda i, j, k: (i, k)),
            pl.BlockSpec((tk, tn), lambda i, j, k: (k, j)),
            pl.BlockSpec((1, tn), lambda i, j, k: (0, j)),
        ],
        out_specs=pl.BlockSpec((tm, tn), lambda i, j, k: (i, j)),
        scratch_shapes=[pltpu.VMEM((tm, tn), jnp.float32)],
        compiler_params=pltpu.CompilerParams(
            dimension_semantics=("parallel", "parallel", "arbitrary")
        ),
    )(x2, w2, b.reshape(1, N).astype(jnp.float32))
    return out.reshape(orig_shape[:-1] + (N,))


def _ln_kernel(eps, x_ref, g_ref, b_ref, o_ref):
    x = x_ref[...].astype(jnp.float32)
    mu = jnp.mean(x, axis=-1, keepdims=True)
    var = jnp.mean(jnp.square(x - mu), axis=-1, keepdims=True)
    y = (x - mu) * jax.lax.rsqrt(var + eps)
    o_ref[...] = (y * g_ref[...] + b_ref[...]).astype(o_ref.dtype)


def layernorm(x, g, b, eps=1e-6, out_dtype=jnp.bfloat16):
    shape = x.shape
    H = shape[-1]
    x2 = x.reshape(-1, H)
    M = x2.shape[0]
    tm = _pick_tile(M, (1024, 512, 256, 128, 8))
    out = pl.pallas_call(
        functools.partial(_ln_kernel, eps),
        out_shape=jax.ShapeDtypeStruct((M, H), out_dtype),
        grid=(M // tm,),
        in_specs=[
            pl.BlockSpec((tm, H), lambda i: (i, 0)),
            pl.BlockSpec((1, H), lambda i: (0, 0)),
            pl.BlockSpec((1, H), lambda i: (0, 0)),
        ],
        out_specs=pl.BlockSpec((tm, H), lambda i: (i, 0)),
        compiler_params=pltpu.CompilerParams(dimension_semantics=("parallel",)),
    )(x2, g.reshape(1, H), b.reshape(1, H))
    return out.reshape(shape)


def _add_ln_kernel(eps, a_ref, b_ref, g_ref, beta_ref, o_ref):
    s = a_ref[...].astype(jnp.float32) + b_ref[...].astype(jnp.float32)
    mu = jnp.mean(s, axis=-1, keepdims=True)
    var = jnp.mean(jnp.square(s - mu), axis=-1, keepdims=True)
    y = (s - mu) * jax.lax.rsqrt(var + eps)
    o_ref[...] = (y * g_ref[...] + beta_ref[...]).astype(o_ref.dtype)


def add_layernorm(a, b, g, beta, eps=1e-6, out_dtype=jnp.bfloat16):
    """LN(a + b); residual add fused into the LayerNorm kernel."""
    shape = a.shape
    H = shape[-1]
    a2 = a.reshape(-1, H)
    b2 = b.reshape(-1, H)
    M = a2.shape[0]
    tm = _pick_tile(M, (1024, 512, 256, 128, 8))
    out = pl.pallas_call(
        functools.partial(_add_ln_kernel, eps),
        out_shape=jax.ShapeDtypeStruct((M, H), out_dtype),
        grid=(M // tm,),
        in_specs=[
            pl.BlockSpec((tm, H), lambda i: (i, 0)),
            pl.BlockSpec((tm, H), lambda i: (i, 0)),
            pl.BlockSpec((1, H), lambda i: (0, 0)),
            pl.BlockSpec((1, H), lambda i: (0, 0)),
        ],
        out_specs=pl.BlockSpec((tm, H), lambda i: (i, 0)),
        compiler_params=pltpu.CompilerParams(dimension_semantics=("parallel",)),
    )(a2, b2, g.reshape(1, H), beta.reshape(1, H))
    return out.reshape(shape)


def _add_ln_sum_kernel(eps, a_ref, b_ref, g_ref, beta_ref, s_ref, o_ref):
    s = a_ref[...].astype(jnp.float32) + b_ref[...].astype(jnp.float32)
    s_ref[...] = s.astype(s_ref.dtype)
    mu = jnp.mean(s, axis=-1, keepdims=True)
    var = jnp.mean(jnp.square(s - mu), axis=-1, keepdims=True)
    y = (s - mu) * jax.lax.rsqrt(var + eps)
    o_ref[...] = (y * g_ref[...] + beta_ref[...]).astype(o_ref.dtype)


def add_layernorm_with_sum(a, b, g, beta, eps=1e-6):
    """Returns (a + b, LN(a + b)) — sum needed for the next residual."""
    shape = a.shape
    H = shape[-1]
    a2 = a.reshape(-1, H)
    b2 = b.reshape(-1, H)
    M = a2.shape[0]
    tm = _pick_tile(M, (1024, 512, 256, 128, 8))
    s, o = pl.pallas_call(
        functools.partial(_add_ln_sum_kernel, eps),
        out_shape=(
            jax.ShapeDtypeStruct((M, H), jnp.bfloat16),
            jax.ShapeDtypeStruct((M, H), jnp.bfloat16),
        ),
        grid=(M // tm,),
        in_specs=[
            pl.BlockSpec((tm, H), lambda i: (i, 0)),
            pl.BlockSpec((tm, H), lambda i: (i, 0)),
            pl.BlockSpec((1, H), lambda i: (0, 0)),
            pl.BlockSpec((1, H), lambda i: (0, 0)),
        ],
        out_specs=[
            pl.BlockSpec((tm, H), lambda i: (i, 0)),
            pl.BlockSpec((tm, H), lambda i: (i, 0)),
        ],
        compiler_params=pltpu.CompilerParams(dimension_semantics=("parallel",)),
    )(a2, b2, g.reshape(1, H), beta.reshape(1, H))
    return s.reshape(shape), o.reshape(shape)


def _attention_kernel(scale, causal, q_ref, k_ref, v_ref, m_ref, o_ref):
    """softmax((q*scale) k^T + keypad [+ causal]) v — all heads, one batch elem."""
    # Scale q before the matmul (matches PreSumm; cheaper than scaling scores).
    q = q_ref[0] * jnp.bfloat16(scale)  # (nh, Sq, dh) bf16
    k = k_ref[0]                        # (nh, Sk, dh) bf16
    v = v_ref[0]                        # (nh, Sk, dh) bf16
    s = jnp.einsum("hqd,hkd->hqk", q, k, preferred_element_type=jnp.float32)
    mask = m_ref[...]                   # (1, 1, Sk) additive key-pad mask (f32)
    if causal:
        Sq, Sk = s.shape[1], s.shape[2]
        row = jax.lax.broadcasted_iota(jnp.int32, (Sq, Sk), 0)
        col = jax.lax.broadcasted_iota(jnp.int32, (Sq, Sk), 1)
        # combine key-pad + causal once -> single full-size add on s below
        mask = mask + jnp.where(col > row, -1e9, 0.0)[None, :, :]
    s = s + mask
    s = s - jnp.max(s, axis=-1, keepdims=True)
    p = jnp.exp(s)
    p = p * pl.reciprocal(jnp.sum(p, axis=-1, keepdims=True), approx=True)
    ctx = jnp.einsum(
        "hqk,hkd->hqd", p.astype(v.dtype), v, preferred_element_type=jnp.float32
    )
    o_ref[0] = ctx.astype(o_ref.dtype)


def attention(q, k, v, key_pad_mask, scale, causal=False):
    """q: (B,nh,Sq,dh), k/v: (B,nh,Sk,dh), key_pad_mask: (B,1,Sk) additive f32."""
    # TODO(synk): for very long concatenated memories, add a flash-style Sk-tile
    # grid axis with m/l/acc scratch so scores never exceed VMEM.
    B, nh, Sq, dh = q.shape
    Sk = k.shape[2]
    return pl.pallas_call(
        functools.partial(_attention_kernel, scale, causal),
        out_shape=jax.ShapeDtypeStruct((B, nh, Sq, dh), jnp.bfloat16),
        grid=(B,),
        in_specs=[
            pl.BlockSpec((1, nh, Sq, dh), lambda b: (b, 0, 0, 0)),
            pl.BlockSpec((1, nh, Sk, dh), lambda b: (b, 0, 0, 0)),
            pl.BlockSpec((1, nh, Sk, dh), lambda b: (b, 0, 0, 0)),
            pl.BlockSpec((1, 1, Sk), lambda b: (b, 0, 0)),
        ],
        out_specs=pl.BlockSpec((1, nh, Sq, dh), lambda b: (b, 0, 0, 0)),
        compiler_params=pltpu.CompilerParams(dimension_semantics=("parallel",)),
    )(q, k, v, key_pad_mask)


# ----------------------------------------------------------------------------
# Model glue (plain JAX around the Pallas kernels)
# ----------------------------------------------------------------------------
def _split_heads(x, nh):
    B, S, H = x.shape
    dh = H // nh
    return x.reshape(B, S, nh, dh).transpose(0, 2, 1, 3)  # (B, nh, S, dh)


def _merge_heads(x):
    B, nh, S, dh = x.shape
    return x.transpose(0, 2, 1, 3).reshape(B, S, nh * dh)


def mha_self(x, key_pad_mask, p, prefix, nheads, causal=False):
    """Self-attention with fused QKV projection. x: (B,S,H)."""
    H = x.shape[-1]
    dh = H // nheads
    qkv = linear(x, p[f"{prefix}_qkv_w"], p[f"{prefix}_qkv_b"])
    q, k, v = jnp.split(qkv, 3, axis=-1)
    ctx = attention(
        _split_heads(q, nheads), _split_heads(k, nheads), _split_heads(v, nheads),
        key_pad_mask, 1.0 / math.sqrt(dh), causal,
    )
    return linear(_merge_heads(ctx), p[f"{prefix}_o_w"], p[f"{prefix}_o_b"])


def mha_cross(q_in, memory, key_pad_mask, p, prefix, nheads):
    """Cross-attention: separate Q projection, fused KV projection of memory."""
    H = q_in.shape[-1]
    dh = H // nheads
    q = linear(q_in, p[f"{prefix}_q_w"], p[f"{prefix}_q_b"])
    kv = linear(memory, p[f"{prefix}_kv_w"], p[f"{prefix}_kv_b"])
    k, v = jnp.split(kv, 2, axis=-1)
    ctx = attention(
        _split_heads(q, nheads), _split_heads(k, nheads), _split_heads(v, nheads),
        key_pad_mask, 1.0 / math.sqrt(dh), False,
    )
    return linear(_merge_heads(ctx), p[f"{prefix}_o_w"], p[f"{prefix}_o_b"])


def bert_encode(p, input_ids, attention_mask, cfg):
    """Simplified BertModel: returns last hidden state (B, S, H) in bf16."""
    B, S = input_ids.shape
    emb = (
        p["bert_word_emb"][input_ids]
        + p["bert_pos_emb"][:S][None]
        + p["bert_type_emb"][0][None, None]
    )
    x = layernorm(emb, p["bert_emb_ln_g"], p["bert_emb_ln_b"], eps=1e-12)
    # Additive key-padding mask, (B, 1, S) — shared across heads / query rows.
    key_pad = ((1.0 - attention_mask.astype(jnp.float32)) * -1e9)[:, None, :]
    for l in range(cfg["enc_layers"]):
        attn_out = mha_self(x, key_pad, p, f"enc{l}_att", cfg["heads"])
        x = add_layernorm(x, attn_out, p[f"enc{l}_ln1_g"], p[f"enc{l}_ln1_b"], eps=1e-12)
        h = linear(x, p[f"enc{l}_ff1_w"], p[f"enc{l}_ff1_b"], act="gelu")
        h = linear(h, p[f"enc{l}_ff2_w"], p[f"enc{l}_ff2_b"])
        x = add_layernorm(x, h, p[f"enc{l}_ln2_g"], p[f"enc{l}_ln2_b"], eps=1e-12)
    return x


def transformer_decoder(p, tgt_ids, memory, memory_ids, cfg):
    """PreSumm-style TransformerDecoder: returns decoder_outputs (B, T, H)."""
    B, T = tgt_ids.shape
    H = cfg["hidden"]

    emb = p["tgt_emb"][tgt_ids] * math.sqrt(H) + p["dec_pe"][:T][None]
    x = emb.astype(jnp.bfloat16)

    tgt_keypad = jnp.where(tgt_ids == 0, -1e9, 0.0).astype(jnp.float32)[:, None, :]
    mem_keypad = jnp.where(memory_ids == 0, -1e9, 0.0).astype(jnp.float32)[:, None, :]

    pending = None  # (y, ff_in) whose sum is the layer's residual output x
    for l in range(cfg["dec_layers"]):
        if pending is None:
            xn = layernorm(x, p[f"dec{l}_ln1_g"], p[f"dec{l}_ln1_b"])
        else:
            x, xn = add_layernorm_with_sum(
                pending[0], pending[1], p[f"dec{l}_ln1_g"], p[f"dec{l}_ln1_b"]
            )
        self_out = mha_self(xn, tgt_keypad, p, f"dec{l}_self", cfg["heads"], causal=True)
        query, qn = add_layernorm_with_sum(
            self_out, x, p[f"dec{l}_ln2_g"], p[f"dec{l}_ln2_b"]
        )
        ctx = mha_cross(qn, memory, mem_keypad, p, f"dec{l}_ctx", cfg["heads"])
        ff_in, y = add_layernorm_with_sum(
            ctx, query, p[f"dec{l}_ff_ln_g"], p[f"dec{l}_ff_ln_b"]
        )
        y = linear(y, p[f"dec{l}_ff1_w"], p[f"dec{l}_ff1_b"], act="gelu")
        y = linear(y, p[f"dec{l}_ff2_w"], p[f"dec{l}_ff2_b"])
        pending = (y, ff_in)

    out = add_layernorm(
        pending[0], pending[1], p["dec_final_ln_g"], p["dec_final_ln_b"],
        out_dtype=jnp.float32,
    )
    return out


def multibertabs_forward(p, sources, target, cfg):
    """MultiBertAbs.forward: encode each source with BERT, concat along seq,
    decode target[:, :-1] against the concatenated memory."""
    enc_ids, enc_hidden = [], []
    for src in sources:
        h = bert_encode(p, src["input_ids"], src["attention_mask"], cfg)
        enc_ids.append(src["input_ids"])
        enc_hidden.append(h)
    encoder_input_ids = jnp.concatenate(enc_ids, axis=1)
    encoder_hidden_states = jnp.concatenate(enc_hidden, axis=1)
    decoder_input_ids = target["input_ids"][:, :-1]
    # init_decoder_state() only builds a cache/mask holder; the padding mask is
    # derived from encoder_input_ids inside transformer_decoder.
    decoder_outputs = transformer_decoder(
        p, decoder_input_ids, encoder_hidden_states, encoder_input_ids, cfg
    )
    return decoder_outputs


# ----------------------------------------------------------------------------
# Deterministic parameter init (mirrors init_weights: normal std=0.02, LN=1/0)
# ----------------------------------------------------------------------------
def _sinusoid_pe(max_len, dim):
    pos = np.arange(max_len)[:, None].astype(np.float64)
    div = np.exp(np.arange(0, dim, 2).astype(np.float64) * -(math.log(10000.0) / dim))
    pe = np.zeros((max_len, dim), dtype=np.float64)
    pe[:, 0::2] = np.sin(pos * div)
    pe[:, 1::2] = np.cos(pos * div)
    return jnp.asarray(pe, jnp.float32)


def init_params(key, cfg):
    keys = iter(jax.random.split(key, 256))
    H, F, V = cfg["hidden"], cfg["ff"], cfg["vocab"]

    def nrm(shape, dtype=jnp.bfloat16):
        return (0.02 * jax.random.normal(next(keys), shape, jnp.float32)).astype(dtype)

    p = {}
    # BERT embeddings (kept f32 for the JAX-side gather/add)
    p["bert_word_emb"] = nrm((V, H), jnp.float32)
    p["bert_pos_emb"] = nrm((cfg["max_pos"], H), jnp.float32)
    p["bert_type_emb"] = nrm((2, H), jnp.float32)
    p["bert_emb_ln_g"] = jnp.ones((H,), jnp.float32)
    p["bert_emb_ln_b"] = jnp.zeros((H,), jnp.float32)
    # BERT encoder layers (fused QKV weights, bf16 matmul operands)
    for l in range(cfg["enc_layers"]):
        p[f"enc{l}_att_qkv_w"] = nrm((H, 3 * H))
        p[f"enc{l}_att_qkv_b"] = jnp.zeros((3 * H,), jnp.float32)
        p[f"enc{l}_att_o_w"] = nrm((H, H))
        p[f"enc{l}_att_o_b"] = jnp.zeros((H,), jnp.float32)
        p[f"enc{l}_ln1_g"] = jnp.ones((H,), jnp.float32)
        p[f"enc{l}_ln1_b"] = jnp.zeros((H,), jnp.float32)
        p[f"enc{l}_ff1_w"] = nrm((H, F))
        p[f"enc{l}_ff1_b"] = jnp.zeros((F,), jnp.float32)
        p[f"enc{l}_ff2_w"] = nrm((F, H))
        p[f"enc{l}_ff2_b"] = jnp.zeros((H,), jnp.float32)
        p[f"enc{l}_ln2_g"] = jnp.ones((H,), jnp.float32)
        p[f"enc{l}_ln2_b"] = jnp.zeros((H,), jnp.float32)
    # Decoder target embedding (padding_idx=0 row zeroed) + sinusoidal positions
    p["tgt_emb"] = nrm((V, H), jnp.float32).at[0].set(0.0)
    p["dec_pe"] = _sinusoid_pe(cfg["max_pos"], H)
    # Decoder layers
    for l in range(cfg["dec_layers"]):
        p[f"dec{l}_self_qkv_w"] = nrm((H, 3 * H))
        p[f"dec{l}_self_qkv_b"] = jnp.zeros((3 * H,), jnp.float32)
        p[f"dec{l}_self_o_w"] = nrm((H, H))
        p[f"dec{l}_self_o_b"] = jnp.zeros((H,), jnp.float32)
        p[f"dec{l}_ctx_q_w"] = nrm((H, H))
        p[f"dec{l}_ctx_q_b"] = jnp.zeros((H,), jnp.float32)
        p[f"dec{l}_ctx_kv_w"] = nrm((H, 2 * H))
        p[f"dec{l}_ctx_kv_b"] = jnp.zeros((2 * H,), jnp.float32)
        p[f"dec{l}_ctx_o_w"] = nrm((H, H))
        p[f"dec{l}_ctx_o_b"] = jnp.zeros((H,), jnp.float32)
        p[f"dec{l}_ln1_g"] = jnp.ones((H,), jnp.float32)
        p[f"dec{l}_ln1_b"] = jnp.zeros((H,), jnp.float32)
        p[f"dec{l}_ln2_g"] = jnp.ones((H,), jnp.float32)
        p[f"dec{l}_ln2_b"] = jnp.zeros((H,), jnp.float32)
        p[f"dec{l}_ff_ln_g"] = jnp.ones((H,), jnp.float32)
        p[f"dec{l}_ff_ln_b"] = jnp.zeros((H,), jnp.float32)
        p[f"dec{l}_ff1_w"] = nrm((H, F))
        p[f"dec{l}_ff1_b"] = jnp.zeros((F,), jnp.float32)
        p[f"dec{l}_ff2_w"] = nrm((F, H))
        p[f"dec{l}_ff2_b"] = jnp.zeros((H,), jnp.float32)
    p["dec_final_ln_g"] = jnp.ones((H,), jnp.float32)
    p["dec_final_ln_b"] = jnp.zeros((H,), jnp.float32)
    return p


# ----------------------------------------------------------------------------
# Main
# ----------------------------------------------------------------------------
if __name__ == "__main__":
    cfg = dict(
        vocab=64,      # small synthetic vocab (stands in for BERT vocab_size)
        hidden=32,     # dec_hidden_size / bert hidden_size
        heads=4,       # dec_heads
        ff=64,         # dec_ff_size
        enc_layers=2,
        dec_layers=2,  # dec_layers
        max_pos=64,
    )
    B, S, T = 2, 8, 8  # batch, per-source src length, target length

    key = jax.random.PRNGKey(0)
    pkey, k1, k2, k3 = jax.random.split(key, 4)
    params = init_params(pkey, cfg)

    # Two synthetic sources (the `sources` list of the forward pass).
    src1_ids = jax.random.randint(k1, (B, S), 1, cfg["vocab"], dtype=jnp.int32)
    src2_ids = jax.random.randint(k2, (B, S), 1, cfg["vocab"], dtype=jnp.int32)
    mask1 = jnp.ones((B, S), jnp.int32)
    # pad the last two positions of the second source
    src2_ids = src2_ids.at[:, -2:].set(0)
    mask2 = mask1.at[:, -2:].set(0)
    sources = [
        {"input_ids": src1_ids, "attention_mask": mask1},
        {"input_ids": src2_ids, "attention_mask": mask2},
    ]
    tgt_ids = jax.random.randint(k3, (B, T), 1, cfg["vocab"], dtype=jnp.int32)
    target = {"input_ids": tgt_ids}

    out = multibertabs_forward(params, sources, target, cfg)
    out = jax.block_until_ready(out)

    assert out.shape == (B, T - 1, cfg["hidden"]), out.shape
    assert bool(jnp.all(jnp.isfinite(out)))
    print("KERNEL_OK")
</pallas_src>

<mosaic_0001>
module attributes {stable_mosaic.version = 11 : i64} {
  func.func @_ln_kernel(%arg0: i32, %arg1: memref<8x32xf32, #tpu.memory_space<vmem>>, %arg2: memref<1x32xf32, #tpu.memory_space<vmem>>, %arg3: memref<1x32xf32, #tpu.memory_space<vmem>>, %arg4: memref<8x32xbf16, #tpu.memory_space<vmem>>) attributes {dimension_semantics = [#tpu.dimension_semantics<parallel>], iteration_bounds = array<i64: 2>, scalar_prefetch = 0 : i64, scratch_operands = 0 : i64, tpu.core_type = #tpu.core_type<tc>, window_params = [{transform_indices = @transform_0, window_bounds = array<i64: 8, 32>}, {pipeline_mode = #tpu.pipeline_mode<synchronous>, transform_indices = @transform_1, window_bounds = array<i64: 1, 32>}, {pipeline_mode = #tpu.pipeline_mode<synchronous>, transform_indices = @transform_2, window_bounds = array<i64: 1, 32>}, {transform_indices = @transform_3, window_bounds = array<i64: 8, 32>}]} {
    %c0 = arith.constant 0 : index
    %c0_0 = arith.constant 0 : index
    %0 = vector.load %arg1[%c0, %c0_0] : memref<8x32xf32, #tpu.memory_space<vmem>>, vector<8x32xf32>
    %cst = arith.constant dense<0.000000e+00> : vector<8xf32>
    %1 = vector.multi_reduction <add>, %0, %cst [1] : vector<8x32xf32> to vector<8xf32>
    %2 = vector.shape_cast %1 : vector<8xf32> to vector<8x1xf32>
    %cst_1 = arith.constant 3.200000e+01 : f32
    %3 = vector.broadcast %cst_1 : f32 to vector<8x1xf32>
    %4 = arith.divf %2, %3 : vector<8x1xf32>
    %5 = vector.broadcast %4 : vector<8x1xf32> to vector<8x32xf32>
    %6 = arith.subf %0, %5 : vector<8x32xf32>
    %7 = arith.mulf %6, %6 : vector<8x32xf32>
    %cst_2 = arith.constant dense<0.000000e+00> : vector<8xf32>
    %8 = vector.multi_reduction <add>, %7, %cst_2 [1] : vector<8x32xf32> to vector<8xf32>
    %9 = vector.shape_cast %8 : vector<8xf32> to vector<8x1xf32>
    %cst_3 = arith.constant 3.200000e+01 : f32
    %10 = vector.broadcast %cst_3 : f32 to vector<8x1xf32>
    %11 = arith.divf %9, %10 : vector<8x1xf32>
    %12 = vector.broadcast %4 : vector<8x1xf32> to vector<8x32xf32>
    %13 = arith.subf %0, %12 : vector<8x32xf32>
    %cst_4 = arith.constant 9.99999996E-13 : f32
    %14 = vector.broadcast %cst_4 : f32 to vector<8x1xf32>
    %15 = arith.addf %11, %14 : vector<8x1xf32>
    %16 = math.rsqrt %15 : vector<8x1xf32>
    %17 = vector.broadcast %16 : vector<8x1xf32> to vector<8x32xf32>
    %18 = arith.mulf %13, %17 : vector<8x32xf32>
    %c0_5 = arith.constant 0 : index
    %c0_6 = arith.constant 0 : index
    %19 = vector.load %arg2[%c0_5, %c0_6] : memref<1x32xf32, #tpu.memory_space<vmem>>, vector<1x32xf32>
    %20 = vector.broadcast %19 : vector<1x32xf32> to vector<8x32xf32>
    %21 = arith.mulf %18, %20 : vector<8x32xf32>
    %c0_7 = arith.constant 0 : index
    %c0_8 = arith.constant 0 : index
    %22 = vector.load %arg3[%c0_7, %c0_8] : memref<1x32xf32, #tpu.memory_space<vmem>>, vector<1x32xf32>
    %23 = vector.broadcast %22 : vector<1x32xf32> to vector<8x32xf32>
    %24 = arith.addf %21, %23 : vector<8x32xf32>
    %25 = arith.truncf %24 : vector<8x32xf32> to vector<8x32xbf16>
    %c0_9 = arith.constant 0 : index
    %c0_10 = arith.constant 0 : index
    %26 = vector.load %arg4[%c0_9, %c0_10] : memref<8x32xbf16, #tpu.memory_space<vmem>>, vector<8x32xbf16>
    tpu.vector_store %arg4[%c0_9, %c0_10], %25 {strides = array<i32>} : memref<8x32xbf16, #tpu.memory_space<vmem>>, vector<8x32xbf16>,
    return
  }
  func.func @transform_0(%arg0: i32) -> (i32, i32) {
    %c0_i32 = arith.constant 0 : i32
    %c0_i32_0 = arith.constant 0 : i32
    return %arg0, %c0_i32 : i32, i32
  }
  func.func @transform_1(%arg0: i32) -> (i32, i32) {
    %c0_i32 = arith.constant 0 : i32
    %c0_i32_0 = arith.constant 0 : i32
    %c0_i32_1 = arith.constant 0 : i32
    return %c0_i32, %c0_i32_0 : i32, i32
  }
  func.func @transform_2(%arg0: i32) -> (i32, i32) {
    %c0_i32 = arith.constant 0 : i32
    %c0_i32_0 = arith.constant 0 : i32
    %c0_i32_1 = arith.constant 0 : i32
    return %c0_i32, %c0_i32_0 : i32, i32
  }
  func.func @transform_3(%arg0: i32) -> (i32, i32) {
    %c0_i32 = arith.constant 0 : i32
    %c0_i32_0 = arith.constant 0 : i32
    return %arg0, %c0_i32 : i32, i32
  }
}

</mosaic_0001>

<llo_original>
// kernel: tpu_custom_call.1
$region0: #{tpu_custom_call.1}
  #allocation0 [shape = 'u32[]', space=smem, size = 0x4, offset = 0x4, fixed_abs, tag = 'smem constant byte address 0x4 - core index']
  #allocation1 [shape = 'u32[72,128]{1,0:T(1,128)}', space=vmem, size = 0x9000, scoped, tag = 'internal scratch']
  %s0 = inlined_call_operand.hbm [shape: f32[16,32], index: 0, kind: input, shape index: {}]
  %s1 = inlined_call_operand.hbm [shape: f32[1,32], index: 1, kind: input, shape index: {}]
  %s2 = inlined_call_operand.vmem [shape: f32[1,32], index: 2, kind: input, shape index: {}]
  %s3 = inlined_call_operand.hbm [shape: bf16[16,32], index: 3, kind: output, shape index: {}]
  %s4 = sld [smem:[#allocation0]]
  $region53: #{tpu_custom_call.1} parent=0
    _
  %s6 = ssub.s32 1, %s4
  %s7 = scalar_select 0, %s6, %s4
  $region1: #{tpu_custom_call.1} parent=0
    #allocation2 [shape = 'u8[8192]{0}', space=vmem, size = 0x2000, scoped, tag = 'input window, operand 0']
    #allocation3 [shape = 's32[2]{0}', space=sflag, size = 0x8, scoped, tag = 'scoped memory for tpu_custom_call.1']
    #allocation4 [shape = 's32[2]{0}', space=sflag, size = 0x8, scoped, tag = 'scoped memory for tpu_custom_call.1']
    #allocation5 [shape = 'u8[512]{0}', space=vmem, size = 0x400, scoped, tag = 'input window, operand 1, single buffered']
    #allocation6 [shape = 's32[1]{0}', space=sflag, size = 0x4, scoped, tag = 'scoped memory for tpu_custom_call.1']
    #allocation7 [shape = 'u8[4096]{0}', space=vmem, size = 0x1000, scoped, tag = 'output window, operand 0']
    %8 = vsyncpa [#allocation3], 0
    %s9 = scalar_lea.sflag [#allocation3], 1
    %10 = vsyncpa %s9, 0
    %11 = vsyncpa [#allocation6], 0
    %12 = vsyncpa [#allocation4], 0
    %s13 = scalar_lea.sflag [#allocation4], 1
    %14 = vsyncpa %s13, 0
    loop: start=0, step=1, limit=4
    $region2: #{tpu_custom_call.1} parent=1 // loop_pre_header
      _
    $region3: #{tpu_custom_call.1} parent=1 // loop_header
      %s16 = sphi 0, %s20
      %p17 = scmp.ge.s32.totalorder %s16, 4
      %s26 = sphi 0, %s28
      %s29 = sphi 0, %s26
      %s30 = sphi 0, %s29
      %s46 = sphi 0, %s30
      %s50 = sphi 0, %s50
      %s52 = sphi 0, %s50
      %s53 = sphi 0, %s52
      %s67 = sphi 0, %s53
      %s71 = sphi 0, %s71
      %s73 = sphi 0, %s71
      %s74 = sphi 0, %s73
      %s88 = sphi 0, %s74
      %s94 = sphi 0, %s96
      %s97 = sphi 0, %s94
      %s98 = sphi 0, %s97
      %s114 = sphi 0, %s98
    $region4: #{tpu_custom_call.1} parent=1 // loop_header_branch
      %19 = sbr.rel (%p17) target = $region8
    $region5: #{tpu_custom_call.1} parent=1 // loop_body
      %s21 = ssub.s32 %s16, 1
      %s22 = ssub.s32 %s16, 2
      %s23 = sadd.s32 %s16, 1
      %s24 = ssub.s32 %s16, %s23
      %p25 = scmp.eq.s32.totalorder %s24, 0
      %s27 = sadd.s32 %s26, 1
      %s28 = scalar_select %p25, %s26, %s27
      %p31 = pneg %p25
      %p32 = scmp.eq.s32.totalorder %s16, 1
      %p33 = por %p31, %p32
      %p34 = scmp.ne.s32.totalorder %s26, %s29
      %p35 = scmp.eq.s32.totalorder %s16, 0
      %p36 = por %p34, %p35
      %p37 = scmp.ne.s32.totalorder %s26, %s29
      %p38 = scmp.eq.s32.totalorder %s21, 1
      %p39 = por %p37, %p38
      %p40 = scmp.ne.s32.totalorder %s29, %s30
      %p41 = scmp.eq.s32.totalorder %s21, 0
      %p42 = por %p40, %p41
      %p43 = scmp.ne.s32.totalorder %s29, %s30
      %p44 = scmp.eq.s32.totalorder %s22, 1
      %p45 = por %p43, %p44
      %p47 = scmp.ne.s32.totalorder %s30, %s46
      %p48 = scmp.eq.s32.totalorder %s22, 0
      %p49 = por %p47, %p48
      %s51 = sadd.s32 %s50, 1
      %p54 = scmp.eq.s32.totalorder %s16, 1
      %p55 = scmp.ne.s32.totalorder %s50, %s52
      %p56 = scmp.eq.s32.totalorder %s16, 0
      %p57 = por %p55, %p56
      %p58 = scmp.ne.s32.totalorder %s50, %s52
      %p59 = scmp.eq.s32.totalorder %s21, 1
      %p60 = por %p58, %p59
      %p61 = scmp.ne.s32.totalorder %s52, %s53
      %p62 = scmp.eq.s32.totalorder %s21, 0
      %p63 = por %p61, %p62
      %p64 = scmp.ne.s32.totalorder %s52, %s53
      %p65 = scmp.eq.s32.totalorder %s22, 1
      %p66 = por %p64, %p65
      %p68 = scmp.ne.s32.totalorder %s53, %s67
      %p69 = scmp.eq.s32.totalorder %s22, 0
      %p70 = por %p68, %p69
      %s72 = sadd.s32 %s71, 1
      %p75 = scmp.eq.s32.totalorder %s16, 1
      %p76 = scmp.ne.s32.totalorder %s71, %s73
      %p77 = scmp.eq.s32.totalorder %s16, 0
      %p78 = por %p76, %p77
      %p79 = scmp.ne.s32.totalorder %s71, %s73
      %p80 = scmp.eq.s32.totalorder %s21, 1
      %p81 = por %p79, %p80
      %p82 = scmp.ne.s32.totalorder %s73, %s74
      %p83 = scmp.eq.s32.totalorder %s21, 0
      %p84 = por %p82, %p83
      %p85 = scmp.ne.s32.totalorder %s73, %s74
      %p86 = scmp.eq.s32.totalorder %s22, 1
      %p87 = por %p85, %p86
      %p89 = scmp.ne.s32.totalorder %s74, %s88
      %p90 = scmp.eq.s32.totalorder %s22, 0
      %p91 = por %p89, %p90
      %s92 = ssub.s32 %s16, %s23
      %p93 = scmp.eq.s32.totalorder %s92, 0
      %s95 = sadd.s32 %s94, 1
      %s96 = scalar_select %p93, %s94, %s95
      %p99 = pneg %p93
      %p100 = scmp.eq.s32.totalorder %s16, 1
      %p101 = por %p99, %p100
      %p102 = scmp.ne.s32.totalorder %s94, %s97
      %p103 = scmp.eq.s32.totalorder %s16, 0
      %p104 = por %p102, %p103
      %p105 = scmp.ne.s32.totalorder %s94, %s97
      %p106 = scmp.eq.s32.totalorder %s21, 1
      %p107 = por %p105, %p106
      %p108 = scmp.ne.s32.totalorder %s97, %s98
      %p109 = scmp.eq.s32.totalorder %s21, 0
      %p110 = por %p108, %p109
      %p111 = scmp.ne.s32.totalorder %s97, %s98
      %p112 = scmp.eq.s32.totalorder %s22, 1
      %p113 = por %p111, %p112
      %p115 = scmp.ne.s32.totalorder %s98, %s114
      %p116 = scmp.eq.s32.totalorder %s22, 0
      %p117 = por %p115, %p116
      %p118 = scmp.le.s32.totalorder 1, %s16
      %p119 = scmp.lt.s32.totalorder %s16, 3
      %p120 = pnand %p118, %p119
      %p121 = pneg %p120
      // Predicated region
      $region9: #{tpu_custom_call.1} parent=5 // pred_check
        _
      $region10: #{tpu_custom_call.1} parent=5 // pred_check_branch
        %123 = sbr.rel (%p120) target = $region12
      $region11: #{tpu_custom_call.1} parent=5 // pred_region
        %s124 = ssub.s32 %s16, 1
        // Predicated region
        $region13: #{tpu_custom_call.1} parent=11 // pred_check
          %p125 = pneg %p63
        $region14: #{tpu_custom_call.1} parent=11 // pred_check_branch
          %127 = sbr.rel (%p125) target = $region16
        $region15: #{tpu_custom_call.1} parent=11 // pred_region
          %129 = vsyncadd [#allocation6], 0
          %s131 = sshll.u32 %s1, 4
          %s132 = int_to_ptr.hbm [resolvable:$true] %s131
          %s133 = sshll.u32 [#allocation5], 4
          %s134 = int_to_ptr.vmem [resolvable:$true] %s133
          %136 = dma.hbm_to_vmem [thread:$0]  %s132, 16, %s134, [#allocation6]
        $region16: #{tpu_custom_call.1} parent=11 // pred_fallthru
          _
        // Predicated region
        $region17: #{tpu_custom_call.1} parent=11 // pred_check
          %p137 = pneg %p84
        $region18: #{tpu_custom_call.1} parent=11 // pred_check_branch
          %139 = sbr.rel (%p137) target = $region20
        $region19: #{tpu_custom_call.1} parent=11 // pred_region
          _
        $region20: #{tpu_custom_call.1} parent=11 // pred_fallthru
          _
      $region12: #{tpu_custom_call.1} parent=5 // pred_fallthru
        _
      %p140 = scmp.lt.s32.totalorder %s16, 2
      // Predicated region
      $region21: #{tpu_custom_call.1} parent=5 // pred_check
        %p141 = pneg %p140
      $region22: #{tpu_custom_call.1} parent=5 // pred_check_branch
        %143 = sbr.rel (%p141) target = $region24
      $region23: #{tpu_custom_call.1} parent=5 // pred_region
        // Predicated region
        $region25: #{tpu_custom_call.1} parent=23 // pred_check
          %p144 = pneg %p36
        $region26: #{tpu_custom_call.1} parent=23 // pred_check_branch
          %146 = sbr.rel (%p144) target = $region28
        $region27: #{tpu_custom_call.1} parent=23 // pred_region
          %s147 = sand.u32 %s26, 1
          %s148 = scalar_lea.sflag [#allocation3], %s147
          %s149 = sand.u32 %s26, 1
          %s150 = smul.addr %s149, 8
          %s151 = scalar_lea.vmem [#allocation2], %s150
          %153 = vsyncadd %s148, 0
          %s154 = smul.addr %s16, 8
          %s155 = scalar_lea.hbm %s0, %s154
          %s157 = sshll.u32 %s155, 4
          %s158 = int_to_ptr.hbm [resolvable:$true] %s157
          %s159 = sshll.u32 %s151, 4
          %s160 = int_to_ptr.vmem [resolvable:$true] %s159
          %162 = dma.hbm_to_vmem [thread:$0]  %s158, 128, %s160, %s148
        $region28: #{tpu_custom_call.1} parent=23 // pred_fallthru
          _
      $region24: #{tpu_custom_call.1} parent=5 // pred_fallthru
        _
      %p163 = scmp.le.s32.totalorder 1, %s16
      %p164 = scmp.lt.s32.totalorder %s16, 3
      %p165 = pnand %p163, %p164
      %p166 = pneg %p165
      // Predicated region
      $region29: #{tpu_custom_call.1} parent=5 // pred_check
        _
      $region30: #{tpu_custom_call.1} parent=5 // pred_check_branch
        %168 = sbr.rel (%p165) target = $region32
      $region31: #{tpu_custom_call.1} parent=5 // pred_region
        %s169 = ssub.s32 %s16, 1
        %s170 = sand.u32 %s29, 1
        %s171 = scalar_lea.sflag [#allocation3], %s170
        %s172 = sand.u32 %s29, 1
        %s173 = smul.addr %s172, 8
        %s174 = scalar_lea.vmem [#allocation2], %s173
        // Predicated region
        $region33: #{tpu_custom_call.1} parent=31 // pred_check
          %p175 = pneg %p42
        $region34: #{tpu_custom_call.1} parent=31 // pred_check_branch
          %177 = sbr.rel (%p175) target = $region36
        $region35: #{tpu_custom_call.1} parent=31 // pred_region
          %179 = dma.done %s171, 128
        $region36: #{tpu_custom_call.1} parent=31 // pred_fallthru
          _
        // Predicated region
        $region37: #{tpu_custom_call.1} parent=31 // pred_check
          %p180 = pneg %p63
        $region38: #{tpu_custom_call.1} parent=31 // pred_check_branch
          %182 = sbr.rel (%p180) target = $region40
        $region39: #{tpu_custom_call.1} parent=31 // pred_region
          %184 = dma.done [#allocation6], 16
        $region40: #{tpu_custom_call.1} parent=31 // pred_fallthru
          _
        %s185 = sand.u32 %s29, 1
        %s186 = scalar_lea.sflag [#allocation3], %s185
        %s187 = sand.u32 %s29, 1
        %s188 = smul.addr %s187, 8
        %s189 = scalar_lea.vmem [#allocation2], %s188
        %p190 = pneg %p42
        %p191 = pneg %p39
        %p192 = pneg %p63
        %p193 = pneg %p60
        %p194 = pneg %p84
        %p195 = pneg %p81
        %p196 = pneg %p110
        %p197 = pneg %p107
        %s198 = sand.u32 %s97, 1
        %s199 = scalar_lea.sflag [#allocation4], %s198
        %s200 = sand.u32 %s97, 1
        %s201 = smul.addr %s200, 4
        %s202 = scalar_lea.vmem [#allocation7], %s201
        %v203 = vld [vmem:[%s174] sm:$0xff]
        %vm204 = vcmask 261120
        %v205 = vsel %vm204, %v203, 0.0
        %206 = vadd.xlane.f32.xlu0 %v205
        %v207 = vpop.xlane.xlu0 %206
        %v208 = vrcp.pop 32.0
        %v209 = vmul.f32 32.0, %v208
        %v210 = vsub.f32 1.0, %v209
        %v211 = vmul.f32 %v208, %v210
        %v212 = vadd.f32 %v208, %v211
        %vm213 = vweird.f32 %v208
        %v214 = vsel %vm213, %v208, %v212
        %v215 = vmul.f32 %v207, %v214
        %v216 = vsub.f32 %v203, %v215
        %v217 = vmul.f32 %v216, %v216
        %v218 = vsel %vm204, %v217, 0.0
        %219 = vadd.xlane.f32.xlu0 %v218
        %v220 = vpop.xlane.xlu0 %219
        %v221 = vmul.f32 %v220, %v214
        %v222 = vadd.f32 %v221, 1e-12
        %v223 = vrsqrt.pop %v222
        %v224 = vmul.f32 %v223, %v222
        %v225 = vmul.f32 %v224, %v223
        %v226 = vmul.f32 0.5, %v225
        %v227 = vsub.f32 1.5, %v226
        %v228 = vmul.f32 %v223, %v227
        %vm229 = vweird.f32 %v222
        %vm230 = vweird.f32 %v223
        %vm231 = vmor %vm229, %vm230
        %v232 = vsel %vm231, %v223, %v228
        %v233 = vmul.f32 %v216, %v232
        %v234 = vld [vmem:[#allocation5] sm:$0x1]
        %v236 = vperm.slane %v234, 0
        %v238 = vmul.f32 %v233, %v236
        %v239 = vld [vmem:[%s2] sm:$0x1]
        %v241 = vperm.slane %v239, 0
        %v243 = vadd.f32 %v238, %v241
        %v244 = vpack.c.bf16 %v243, %v243
        %vm245 = vcmask 257024
        %246 = vst.msk [vmem:[%s202] sm:$0xf] %vm245, %v244
        %s247 = sand.u32 %s97, 1
        %s248 = scalar_lea.sflag [#allocation4], %s247
        %s249 = sand.u32 %s97, 1
        %s250 = smul.addr %s249, 4
        %s251 = scalar_lea.vmem [#allocation7], %s250
        // Predicated region
        $region41: #{tpu_custom_call.1} parent=31 // pred_check
          %p252 = pneg %p107
        $region42: #{tpu_custom_call.1} parent=31 // pred_check_branch
          %254 = sbr.rel (%p252) target = $region44
        $region43: #{tpu_custom_call.1} parent=31 // pred_region
          %256 = vsyncadd %s248, 0
          %s257 = smul.addr %s21, 4
          %s258 = scalar_lea.hbm %s3, %s257
          %s260 = sshll.u32 %s251, 4
          %s261 = int_to_ptr.vmem [resolvable:$true] %s260
          %s262 = sshll.u32 %s258, 4
          %s263 = int_to_ptr.hbm [resolvable:$true] %s262
          %265 = dma.vmem_to_hbm [thread:$0]  %s261, 64, %s263, %s248
        $region44: #{tpu_custom_call.1} parent=31 // pred_fallthru
          _
      $region32: #{tpu_custom_call.1} parent=5 // pred_fallthru
        _
      %p266 = scmp.le.s32.totalorder 2, %s16
      // Predicated region
      $region45: #{tpu_custom_call.1} parent=5 // pred_check
        %p267 = pneg %p266
      $region46: #{tpu_custom_call.1} parent=5 // pred_check_branch
        %269 = sbr.rel (%p267) target = $region48
      $region47: #{tpu_custom_call.1} parent=5 // pred_region
        %s270 = ssub.s32 %s16, 2
        // Predicated region
        $region49: #{tpu_custom_call.1} parent=47 // pred_check
          %p271 = pneg %p113
        $region50: #{tpu_custom_call.1} parent=47 // pred_check_branch
          %273 = sbr.rel (%p271) target = $region52
        $region51: #{tpu_custom_call.1} parent=47 // pred_region
          %s274 = sand.u32 %s98, 1
          %s275 = scalar_lea.sflag [#allocation4], %s274
          %s276 = sand.u32 %s98, 1
          %s277 = smul.addr %s276, 4
          %s278 = scalar_lea.vmem [#allocation7], %s277
          %280 = dma.done %s275, 64
        $region52: #{tpu_custom_call.1} parent=47 // pred_fallthru
          _
      $region48: #{tpu_custom_call.1} parent=5 // pred_fallthru
        _
    $region6: #{tpu_custom_call.1} parent=1 // loop_footer
      %s20 = sadd.s32 1, %s16
    $region7: #{tpu_custom_call.1} parent=1 // loop_footer_branch
      %15 = sbr.rel target = $region3
    $region8: #{tpu_custom_call.1} parent=1 // loop_exit
      _
    %281 = vsyncpa [#allocation3], 1
    %s282 = scalar_lea.sflag [#allocation3], 1
    %283 = vsyncpa %s282, 1
    %284 = vsyncpa [#allocation6], 1
    %285 = vsyncpa [#allocation4], 1
    %s286 = scalar_lea.sflag [#allocation4], 1
    %287 = vsyncpa %s286, 1

</llo_original>
